<compile_context>
chip_gen: v6e
topology: v6e:2x2x1
jax: 0.10.0
libtpu: 0.0.40
codegen_flags: <defaults>
</compile_context>

<pallas_src>
import jax
import jax.numpy as jnp
from jax.experimental import pallas as pl
from jax.experimental.pallas import tpu as pltpu

STATE_SIZE = 48
ACTION_SIZE = 4
HIDDEN = 200            # logical layer width from the PyTorch module
HIDDEN_PAD = 256        # lane-dense padded width
NEG_SLOPE = 0.01        # F.leaky_relu default negative slope
MAX_TILE = 2048         # batch-tile upper bound (few MiB VMEM per tile)
MIN_SPLIT_BATCH = 128   # above this, force >=2 tiles so both v7x TCs get work


def _cdiv(a, b):
    return (a + b - 1) // b


def _round_up(x, m):
    return ((x + m - 1) // m) * m


def _lrelu(x):
    # 2 VPU ops (mul + max) per vreg instead of cmp + mul + select.
    return jnp.maximum(x, NEG_SLOPE * x)


def critic_kernel(state_ref, action_ref,
                  w1_ref, b1_ref,
                  w2a_ref, w2b_ref, b2_ref,
                  w3_ref, b3_ref,
                  w4_ref, b4_ref,
                  out_ref):
    state = state_ref[...]                      # (TB, 48)
    action = action_ref[...]                    # (TB, 4)

    # fc1a; the two stacked leaky_relus on the xa half fuse into one op:
    # lrelu(lrelu(x)) == max(x, NEG_SLOPE**2 * x)   (exact for slope in (0,1))
    pre1 = jnp.dot(state, w1_ref[...], preferred_element_type=jnp.float32) + b1_ref[...]
    x2a = jnp.maximum(pre1, (NEG_SLOPE * NEG_SLOPE) * pre1)    # (TB, 256)

    # action half of the concat gets a single leaky_relu
    x2b = _lrelu(action)                        # (TB, 4)

    # fc2: both halves of the split weight on the MXU (K=256 and K=4)
    pre2 = (jnp.dot(x2a, w2a_ref[...], preferred_element_type=jnp.float32)
            + jnp.dot(x2b, w2b_ref[...], preferred_element_type=jnp.float32)
            + b2_ref[...])
    x3 = _lrelu(pre2)                           # (TB, 256)

    # fc3
    pre3 = jnp.dot(x3, w3_ref[...], preferred_element_type=jnp.float32) + b3_ref[...]
    x4 = _lrelu(pre3)                           # (TB, 256)

    # fc4 (N=1): VPU multiply + cross-lane reduce instead of a 1-column matmul
    out_ref[...] = jnp.sum(x4 * w4_ref[...], axis=-1, keepdims=True) + b4_ref[...]


def init_params(seed=0):
    """Deterministic synthetic init mirroring the module's init scheme.

    hidden_init uses weight.size()[0] == out_features, so lim = 1/sqrt(out).
    Biases use the PyTorch nn.Linear default: uniform(+-1/sqrt(in_features)).
    Weights are stored transposed: [in_features, out_features].
    """
    key = jax.random.PRNGKey(seed)
    ks = jax.random.split(key, 8)
    h1 = h2 = h3 = HIDDEN

    def u(k, shape, lim):
        return jax.random.uniform(k, shape, jnp.float32, -lim, lim)

    w1 = u(ks[0], (STATE_SIZE, h1), 1.0 / jnp.sqrt(h1))
    b1 = u(ks[1], (1, h1), 1.0 / jnp.sqrt(STATE_SIZE))
    # fc2: in = h1 + action_size; split into [h1, h2] and [action_size, h2]
    w2 = u(ks[2], (h1 + ACTION_SIZE, h2), 1.0 / jnp.sqrt(h2))
    w2a = w2[:h1, :]
    w2b = w2[h1:, :]
    b2 = u(ks[3], (1, h2), 1.0 / jnp.sqrt(h1 + ACTION_SIZE))
    w3 = u(ks[4], (h2, h3), 1.0 / jnp.sqrt(h3))
    b3 = u(ks[5], (1, h3), 1.0 / jnp.sqrt(h2))
    w4 = u(ks[6], (h3, 1), 0.003)
    b4 = u(ks[7], (1, 1), 1.0 / jnp.sqrt(h3))
    return (w1, b1, w2a, w2b, b2, w3, b3, w4, b4)


def pad_params(params):
    """Zero-pad feature dims 200 -> 256 (lane-dense); w4 becomes a (1, 256) row.

    Zero padding keeps the used columns bit-identical: padded lanes carry
    exact zeros through every layer (lrelu(0) == 0, zero weight columns/rows).
    """
    w1, b1, w2a, w2b, b2, w3, b3, w4, b4 = params
    H, HP = HIDDEN, HIDDEN_PAD
    w1p = jnp.zeros((STATE_SIZE, HP), jnp.float32).at[:, :H].set(w1)
    b1p = jnp.zeros((1, HP), jnp.float32).at[:, :H].set(b1)
    w2ap = jnp.zeros((HP, HP), jnp.float32).at[:H, :H].set(w2a)
    w2bp = jnp.zeros((ACTION_SIZE, HP), jnp.float32).at[:, :H].set(w2b)
    b2p = jnp.zeros((1, HP), jnp.float32).at[:, :H].set(b2)
    w3p = jnp.zeros((HP, HP), jnp.float32).at[:H, :H].set(w3)
    b3p = jnp.zeros((1, HP), jnp.float32).at[:, :H].set(b3)
    w4p = jnp.zeros((1, HP), jnp.float32).at[:, :H].set(w4.T)
    b4p = jnp.reshape(b4, (1, 1)).astype(jnp.float32)
    return (w1p, b1p, w2ap, w2bp, b2p, w3p, b3p, w4p, b4p)


def _choose_tiling(batch):
    """Pick (tile, padded_batch) so padding is <= 7 rows/tile and v7x gets >=2 tiles."""
    num_tiles = _cdiv(batch, MAX_TILE)
    if batch > MIN_SPLIT_BATCH:
        num_tiles = max(num_tiles, 2)      # megacore: keep both TCs busy on v7x
    tb = _round_up(_cdiv(batch, num_tiles), 8)
    b_pad = num_tiles * tb
    return tb, b_pad


@jax.jit
def critic_forward(state, action, padded_params):
    # Glue: the .view(-1, 48) / .view(-1, 4) reshapes
    state = jnp.reshape(state, (-1, STATE_SIZE)).astype(jnp.float32)
    action = jnp.reshape(action, (-1, ACTION_SIZE)).astype(jnp.float32)
    batch = state.shape[0]

    tb, b_pad = _choose_tiling(batch)
    if b_pad != batch:
        state = jnp.pad(state, ((0, b_pad - batch), (0, 0)))
        action = jnp.pad(action, ((0, b_pad - batch), (0, 0)))

    grid = (b_pad // tb,)
    tile_map = lambda i: (i, 0)       # batch-tiled operands
    resident = lambda i: (0, 0)       # weights/biases resident across iterations

    in_specs = [
        pl.BlockSpec((tb, STATE_SIZE), tile_map),
        pl.BlockSpec((tb, ACTION_SIZE), tile_map),
    ] + [pl.BlockSpec(p.shape, resident) for p in padded_params]
    out_spec = pl.BlockSpec((tb, 1), tile_map)   # lane-1 column; no broadcast slab

    out = pl.pallas_call(
        critic_kernel,
        out_shape=jax.ShapeDtypeStruct((b_pad, 1), jnp.float32),
        grid=grid,
        in_specs=in_specs,
        out_specs=out_spec,
        compiler_params=pltpu.CompilerParams(
            dimension_semantics=("parallel",),      # megacore sharding on v7x
            vmem_limit_bytes=32 * 1024 * 1024,      # explicit, fits all chips
        ),
    )(state, action, *padded_params)

    return out[:batch]


def critic_reference(state, action, params):
    """Pure-JAX reference (unpadded) for a correctness check."""
    w1, b1, w2a, w2b, b2, w3, b3, w4, b4 = params
    state = jnp.reshape(state, (-1, STATE_SIZE)).astype(jnp.float32)
    action = jnp.reshape(action, (-1, ACTION_SIZE)).astype(jnp.float32)

    def lrelu(x):
        return jnp.where(x > 0, x, NEG_SLOPE * x)

    xa = lrelu(state @ w1 + b1)
    x2 = lrelu(jnp.concatenate([xa, action], axis=1))
    w2 = jnp.concatenate([w2a, w2b], axis=0)
    x3 = lrelu(x2 @ w2 + b2)
    x4 = lrelu(x3 @ w3 + b3)
    return x4 @ w4 + b4


if __name__ == "__main__":
    key = jax.random.PRNGKey(0)
    k_s, k_a = jax.random.split(key)

    batch = 8
    # Inputs as the Tennis env would give them (2 agents x 24 obs = 48 after view)
    state = jax.random.normal(k_s, (batch, 2, 24), jnp.float32)
    action = jax.random.normal(k_a, (batch, 2, 2), jnp.float32)

    params = init_params(seed=0)
    padded = pad_params(params)

    out = critic_forward(state, action, padded)
    out = jax.block_until_ready(out)

    ref = critic_reference(state, action, params)
    assert out.shape == (batch, 1), out.shape
    assert jnp.allclose(out, ref, atol=1e-5, rtol=1e-5), "mismatch vs reference"

    print("KERNEL_OK")
</pallas_src>

<mosaic_0001>
module attributes {stable_mosaic.version = 11 : i64} {
  func.func @critic_kernel(%arg0: i32, %arg1: memref<8x48xf32, #tpu.memory_space<vmem>>, %arg2: memref<8x4xf32, #tpu.memory_space<vmem>>, %arg3: memref<48x256xf32, #tpu.memory_space<vmem>>, %arg4: memref<1x256xf32, #tpu.memory_space<vmem>>, %arg5: memref<256x256xf32, #tpu.memory_space<vmem>>, %arg6: memref<4x256xf32, #tpu.memory_space<vmem>>, %arg7: memref<1x256xf32, #tpu.memory_space<vmem>>, %arg8: memref<256x256xf32, #tpu.memory_space<vmem>>, %arg9: memref<1x256xf32, #tpu.memory_space<vmem>>, %arg10: memref<1x256xf32, #tpu.memory_space<vmem>>, %arg11: memref<1x1xf32, #tpu.memory_space<vmem>>, %arg12: memref<8x1xf32, #tpu.memory_space<vmem>>) attributes {dimension_semantics = [#tpu.dimension_semantics<parallel>], iteration_bounds = array<i64: 1>, scalar_prefetch = 0 : i64, scratch_operands = 0 : i64, tpu.core_type = #tpu.core_type<tc>, window_params = [{transform_indices = @transform_0, window_bounds = array<i64: 8, 48>}, {transform_indices = @transform_1, window_bounds = array<i64: 8, 4>}, {pipeline_mode = #tpu.pipeline_mode<synchronous>, transform_indices = @transform_2, window_bounds = array<i64: 48, 256>}, {pipeline_mode = #tpu.pipeline_mode<synchronous>, transform_indices = @transform_3, window_bounds = array<i64: 1, 256>}, {pipeline_mode = #tpu.pipeline_mode<synchronous>, transform_indices = @transform_4, window_bounds = array<i64: 256, 256>}, {pipeline_mode = #tpu.pipeline_mode<synchronous>, transform_indices = @transform_5, window_bounds = array<i64: 4, 256>}, {pipeline_mode = #tpu.pipeline_mode<synchronous>, transform_indices = @transform_6, window_bounds = array<i64: 1, 256>}, {pipeline_mode = #tpu.pipeline_mode<synchronous>, transform_indices = @transform_7, window_bounds = array<i64: 256, 256>}, {pipeline_mode = #tpu.pipeline_mode<synchronous>, transform_indices = @transform_8, window_bounds = array<i64: 1, 256>}, {pipeline_mode = #tpu.pipeline_mode<synchronous>, transform_indices = @transform_9, window_bounds = array<i64: 1, 256>}, {pipeline_mode = #tpu.pipeline_mode<synchronous>, transform_indices = @transform_10, window_bounds = array<i64: 1, 1>}, {transform_indices = @transform_11, window_bounds = array<i64: 8, 1>}]} {
    %c0 = arith.constant 0 : index
    %c0_0 = arith.constant 0 : index
    %0 = vector.load %arg1[%c0, %c0_0] : memref<8x48xf32, #tpu.memory_space<vmem>>, vector<8x48xf32>
    %c0_1 = arith.constant 0 : index
    %c0_2 = arith.constant 0 : index
    %1 = vector.load %arg2[%c0_1, %c0_2] : memref<8x4xf32, #tpu.memory_space<vmem>>, vector<8x4xf32>
    %c0_3 = arith.constant 0 : index
    %c0_4 = arith.constant 0 : index
    %2 = vector.load %arg3[%c0_3, %c0_4] : memref<48x256xf32, #tpu.memory_space<vmem>>, vector<48x256xf32>
    %cst = arith.constant dense<0.000000e+00> : vector<8x256xf32>
    %3 = tpu.matmul %0, %2, %cst {dimension_numbers = #tpu.dot_dimension_numbers<[1], [0], [0], [1], [0, 0, 1, 1], [], []>} : vector<8x48xf32>, vector<48x256xf32>, vector<8x256xf32> -> vector<8x256xf32>
    %c0_5 = arith.constant 0 : index
    %c0_6 = arith.constant 0 : index
    %4 = vector.load %arg4[%c0_5, %c0_6] : memref<1x256xf32, #tpu.memory_space<vmem>>, vector<1x256xf32>
    %5 = vector.broadcast %4 : vector<1x256xf32> to vector<8x256xf32>
    %6 = arith.addf %3, %5 : vector<8x256xf32>
    %cst_7 = arith.constant 9.99999974E-5 : f32
    %7 = vector.broadcast %cst_7 : f32 to vector<8x256xf32>
    %8 = arith.mulf %7, %6 : vector<8x256xf32>
    %9 = arith.maximumf %6, %8 : vector<8x256xf32>
    %cst_8 = arith.constant 0.00999999977 : f32
    %10 = vector.broadcast %cst_8 : f32 to vector<8x4xf32>
    %11 = arith.mulf %10, %1 : vector<8x4xf32>
    %12 = arith.maximumf %1, %11 : vector<8x4xf32>
    %c0_9 = arith.constant 0 : index
    %c0_10 = arith.constant 0 : index
    %13 = vector.load %arg5[%c0_9, %c0_10] : memref<256x256xf32, #tpu.memory_space<vmem>>, vector<256x256xf32>
    %cst_11 = arith.constant dense<0.000000e+00> : vector<8x256xf32>
    %14 = tpu.matmul %9, %13, %cst_11 {dimension_numbers = #tpu.dot_dimension_numbers<[1], [0], [0], [1], [0, 0, 1, 1], [], []>} : vector<8x256xf32>, vector<256x256xf32>, vector<8x256xf32> -> vector<8x256xf32>
    %c0_12 = arith.constant 0 : index
    %c0_13 = arith.constant 0 : index
    %15 = vector.load %arg6[%c0_12, %c0_13] : memref<4x256xf32, #tpu.memory_space<vmem>>, vector<4x256xf32>
    %cst_14 = arith.constant dense<0.000000e+00> : vector<8x256xf32>
    %16 = tpu.matmul %12, %15, %cst_14 {dimension_numbers = #tpu.dot_dimension_numbers<[1], [0], [0], [1], [0, 0, 1, 1], [], []>} : vector<8x4xf32>, vector<4x256xf32>, vector<8x256xf32> -> vector<8x256xf32>
    %17 = arith.addf %14, %16 : vector<8x256xf32>
    %c0_15 = arith.constant 0 : index
    %c0_16 = arith.constant 0 : index
    %18 = vector.load %arg7[%c0_15, %c0_16] : memref<1x256xf32, #tpu.memory_space<vmem>>, vector<1x256xf32>
    %19 = vector.broadcast %18 : vector<1x256xf32> to vector<8x256xf32>
    %20 = arith.addf %17, %19 : vector<8x256xf32>
    %cst_17 = arith.constant 0.00999999977 : f32
    %21 = vector.broadcast %cst_17 : f32 to vector<8x256xf32>
    %22 = arith.mulf %21, %20 : vector<8x256xf32>
    %23 = arith.maximumf %20, %22 : vector<8x256xf32>
    %c0_18 = arith.constant 0 : index
    %c0_19 = arith.constant 0 : index
    %24 = vector.load %arg8[%c0_18, %c0_19] : memref<256x256xf32, #tpu.memory_space<vmem>>, vector<256x256xf32>
    %cst_20 = arith.constant dense<0.000000e+00> : vector<8x256xf32>
    %25 = tpu.matmul %23, %24, %cst_20 {dimension_numbers = #tpu.dot_dimension_numbers<[1], [0], [0], [1], [0, 0, 1, 1], [], []>} : vector<8x256xf32>, vector<256x256xf32>, vector<8x256xf32> -> vector<8x256xf32>
    %c0_21 = arith.constant 0 : index
    %c0_22 = arith.constant 0 : index
    %26 = vector.load %arg9[%c0_21, %c0_22] : memref<1x256xf32, #tpu.memory_space<vmem>>, vector<1x256xf32>
    %27 = vector.broadcast %26 : vector<1x256xf32> to vector<8x256xf32>
    %28 = arith.addf %25, %27 : vector<8x256xf32>
    %cst_23 = arith.constant 0.00999999977 : f32
    %29 = vector.broadcast %cst_23 : f32 to vector<8x256xf32>
    %30 = arith.mulf %29, %28 : vector<8x256xf32>
    %31 = arith.maximumf %28, %30 : vector<8x256xf32>
    %c0_24 = arith.constant 0 : index
    %c0_25 = arith.constant 0 : index
    %32 = vector.load %arg10[%c0_24, %c0_25] : memref<1x256xf32, #tpu.memory_space<vmem>>, vector<1x256xf32>
    %33 = vector.broadcast %32 : vector<1x256xf32> to vector<8x256xf32>
    %34 = arith.mulf %31, %33 : vector<8x256xf32>
    %cst_26 = arith.constant dense<0.000000e+00> : vector<8xf32>
    %35 = vector.multi_reduction <add>, %34, %cst_26 [1] : vector<8x256xf32> to vector<8xf32>
    %36 = vector.shape_cast %35 : vector<8xf32> to vector<8x1xf32>
    %c0_27 = arith.constant 0 : index
    %c0_28 = arith.constant 0 : index
    %37 = vector.load %arg11[%c0_27, %c0_28] : memref<1x1xf32, #tpu.memory_space<vmem>>, vector<1x1xf32>
    %38 = vector.broadcast %37 : vector<1x1xf32> to vector<8x1xf32>
    %39 = arith.addf %36, %38 : vector<8x1xf32>
    %c0_29 = arith.constant 0 : index
    %c0_30 = arith.constant 0 : index
    %40 = vector.load %arg12[%c0_29, %c0_30] : memref<8x1xf32, #tpu.memory_space<vmem>>, vector<8x1xf32>
    tpu.vector_store %arg12[%c0_29, %c0_30], %39 {strides = array<i32>} : memref<8x1xf32, #tpu.memory_space<vmem>>, vector<8x1xf32>,
    return
  }
  func.func @transform_0(%arg0: i32) -> (i32, i32) {
    %c0_i32 = arith.constant 0 : i32
    %c0_i32_0 = arith.constant 0 : i32
    return %arg0, %c0_i32 : i32, i32
  }
  func.func @transform_1(%arg0: i32) -> (i32, i32) {
    %c0_i32 = arith.constant 0 : i32
    %c0_i32_0 = arith.constant 0 : i32
    return %arg0, %c0_i32 : i32, i32
  }
  func.func @transform_2(%arg0: i32) -> (i32, i32) {
    %c0_i32 = arith.constant 0 : i32
    %c0_i32_0 = arith.constant 0 : i32
    %c0_i32_1 = arith.constant 0 : i32
    return %c0_i32, %c0_i32_0 : i32, i32
  }
  func.func @transform_3(%arg0: i32) -> (i32, i32) {
    %c0_i32 = arith.constant 0 : i32
    %c0_i32_0 = arith.constant 0 : i32
    %c0_i32_1 = arith.constant 0 : i32
    return %c0_i32, %c0_i32_0 : i32, i32
  }
  func.func @transform_4(%arg0: i32) -> (i32, i32) {
    %c0_i32 = arith.constant 0 : i32
    %c0_i32_0 = arith.constant 0 : i32
    %c0_i32_1 = arith.constant 0 : i32
    return %c0_i32, %c0_i32_0 : i32, i32
  }
  func.func @transform_5(%arg0: i32) -> (i32, i32) {
    %c0_i32 = arith.constant 0 : i32
    %c0_i32_0 = arith.constant 0 : i32
    %c0_i32_1 = arith.constant 0 : i32
    return %c0_i32, %c0_i32_0 : i32, i32
  }
  func.func @transform_6(%arg0: i32) -> (i32, i32) {
    %c0_i32 = arith.constant 0 : i32
    %c0_i32_0 = arith.constant 0 : i32
    %c0_i32_1 = arith.constant 0 : i32
    return %c0_i32, %c0_i32_0 : i32, i32
  }
  func.func @transform_7(%arg0: i32) -> (i32, i32) {
    %c0_i32 = arith.constant 0 : i32
    %c0_i32_0 = arith.constant 0 : i32
    %c0_i32_1 = arith.constant 0 : i32
    return %c0_i32, %c0_i32_0 : i32, i32
  }
  func.func @transform_8(%arg0: i32) -> (i32, i32) {
    %c0_i32 = arith.constant 0 : i32
    %c0_i32_0 = arith.constant 0 : i32
    %c0_i32_1 = arith.constant 0 : i32
    return %c0_i32, %c0_i32_0 : i32, i32
  }
  func.func @transform_9(%arg0: i32) -> (i32, i32) {
    %c0_i32 = arith.constant 0 : i32
    %c0_i32_0 = arith.constant 0 : i32
    %c0_i32_1 = arith.constant 0 : i32
    return %c0_i32, %c0_i32_0 : i32, i32
  }
  func.func @transform_10(%arg0: i32) -> (i32, i32) {
    %c0_i32 = arith.constant 0 : i32
    %c0_i32_0 = arith.constant 0 : i32
    %c0_i32_1 = arith.constant 0 : i32
    return %c0_i32, %c0_i32_0 : i32, i32
  }
  func.func @transform_11(%arg0: i32) -> (i32, i32) {
    %c0_i32 = arith.constant 0 : i32
    %c0_i32_0 = arith.constant 0 : i32
    return %arg0, %c0_i32 : i32, i32
  }
}

</mosaic_0001>

<llo_original>
// kernel: critic_forward.1
$region0: #{critic_forward.1}
  #allocation0 [shape = 'u32[]', space=smem, size = 0x4, offset = 0x4, fixed_abs, tag = 'smem constant byte address 0x4 - core index']
  #allocation1 [shape = 'u32[144,128]{1,0:T(1,128)}', space=vmem, size = 0x12000, scoped, tag = 'internal scratch']
  #allocation2 [shape = 'f32[1,1]{1,0:T(1,128)S(1)}', space=vmem, size = 0x200, scoped, tag = 'scoped memory for critic_forward.1']
  %s0 = inlined_call_operand.vmem [shape: f32[8,48], index: 0, kind: input, shape index: {}]
  %s1 = inlined_call_operand.vmem [shape: f32[8,4], index: 1, kind: input, shape index: {}]
  %s2 = inlined_call_operand.hbm [shape: f32[48,256], index: 2, kind: input, shape index: {}]
  %s3 = inlined_call_operand.vmem [shape: f32[1,256], index: 3, kind: input, shape index: {}]
  %s4 = inlined_call_operand.hbm [shape: f32[256,256], index: 4, kind: input, shape index: {}]
  %s5 = inlined_call_operand.vmem [shape: f32[4,256], index: 5, kind: input, shape index: {}]
  %s6 = inlined_call_operand.vmem [shape: f32[1,256], index: 6, kind: input, shape index: {}]
  %s7 = inlined_call_operand.hbm [shape: f32[256,256], index: 7, kind: input, shape index: {}]
  %s8 = inlined_call_operand.vmem [shape: f32[1,256], index: 8, kind: input, shape index: {}]
  %s9 = inlined_call_operand.vmem [shape: f32[1,256], index: 9, kind: input, shape index: {}]
  %s10 = inlined_call_operand.<no memory space> [shape: f32[1,1], index: 10, kind: input, shape index: {}]
  %s11 = inlined_call_operand.vmem [shape: f32[8,1], index: 11, kind: output, shape index: {}]
  %s12 = sld [smem:[#allocation0]]
  $region66: #{critic_forward.1} parent=0
    _
  %s14 = ssub.s32 1, %s12
  %s15 = scalar_select 0, %s14, %s12
  %v16 = vstv %s10
  %17 = vst [vmem:[#allocation2] sm:$0x1] %v16
  $region1: #{critic_forward.1} parent=0
    #allocation3 [shape = 'u8[49152]{0}', space=vmem, size = 0xc000, scoped, tag = 'input window, operand 2, single buffered']
    #allocation4 [shape = 's32[1]{0}', space=sflag, size = 0x4, scoped, tag = 'scoped memory for critic_forward.1']
    #allocation5 [shape = 'u8[262144]{0}', space=vmem, size = 0x40000, scoped, tag = 'input window, operand 4, single buffered']
    #allocation6 [shape = 's32[1]{0}', space=sflag, size = 0x4, scoped, tag = 'scoped memory for critic_forward.1']
    #allocation7 [shape = 'u8[262144]{0}', space=vmem, size = 0x40000, scoped, tag = 'input window, operand 7, single buffered']
    %18 = vsyncpa [#allocation4], 0
    %19 = vsyncpa [#allocation6], 0
    // Predicated region
    $region2: #{critic_forward.1} parent=1 // pred_check
      _
    $region3: #{critic_forward.1} parent=1 // pred_check_branch
      %21 = sbr.rel (0) target = $region5
    $region4: #{critic_forward.1} parent=1 // pred_region
      _
    $region5: #{critic_forward.1} parent=1 // pred_fallthru
      _
    // Predicated region
    $region6: #{critic_forward.1} parent=1 // pred_check
      _
    $region7: #{critic_forward.1} parent=1 // pred_check_branch
      %23 = sbr.rel (0) target = $region9
    $region8: #{critic_forward.1} parent=1 // pred_region
      _
    $region9: #{critic_forward.1} parent=1 // pred_fallthru
      _
    // Predicated region
    $region10: #{critic_forward.1} parent=1 // pred_check
      _
    $region11: #{critic_forward.1} parent=1 // pred_check_branch
      %25 = sbr.rel (0) target = $region13
    $region12: #{critic_forward.1} parent=1 // pred_region
      %s27 = ssub.s32 1536, 1536
      %28 = vsyncadd [#allocation4], %s27
      %s29 = sshll.u32 [#allocation3], 4
      %s30 = int_to_ptr.vmem [resolvable:$true] %s29
      %35 = dma.hbm_to_vmem [thread:$0]  %s2, 1536, %s30, [#allocation4], 256, 256, 16
    $region13: #{critic_forward.1} parent=1 // pred_fallthru
      _
    // Predicated region
    $region14: #{critic_forward.1} parent=1 // pred_check
      _
    $region15: #{critic_forward.1} parent=1 // pred_check_branch
      %37 = sbr.rel (0) target = $region17
    $region16: #{critic_forward.1} parent=1 // pred_region
      _
    $region17: #{critic_forward.1} parent=1 // pred_fallthru
      _
    // Predicated region
    $region18: #{critic_forward.1} parent=1 // pred_check
      _
    $region19: #{critic_forward.1} parent=1 // pred_check_branch
      %39 = sbr.rel (0) target = $region21
    $region20: #{critic_forward.1} parent=1 // pred_region
      %s41 = ssub.s32 8192, 8192
      %42 = vsyncadd [#allocation6], %s41
      %s43 = sshll.u32 [#allocation5], 4
      %s44 = int_to_ptr.vmem [resolvable:$true] %s43
      %49 = dma.hbm_to_vmem [thread:$0]  %s4, 8192, %s44, [#allocation6], 256, 256, 16
    $region21: #{critic_forward.1} parent=1 // pred_fallthru
      _
    // Predicated region
    $region22: #{critic_forward.1} parent=1 // pred_check
      _
    $region23: #{critic_forward.1} parent=1 // pred_check_branch
      %51 = sbr.rel (0) target = $region25
    $region24: #{critic_forward.1} parent=1 // pred_region
      _
    $region25: #{critic_forward.1} parent=1 // pred_fallthru
      _
    // Predicated region
    $region26: #{critic_forward.1} parent=1 // pred_check
      _
    $region27: #{critic_forward.1} parent=1 // pred_check_branch
      %53 = sbr.rel (0) target = $region29
    $region28: #{critic_forward.1} parent=1 // pred_region
      _
    $region29: #{critic_forward.1} parent=1 // pred_fallthru
      _
    // Predicated region
    $region30: #{critic_forward.1} parent=1 // pred_check
      _
    $region31: #{critic_forward.1} parent=1 // pred_check_branch
      %55 = sbr.rel (0) target = $region33
    $region32: #{critic_forward.1} parent=1 // pred_region
      %s57 = ssub.s32 8192, 8192
      %58 = vsyncadd [#allocation6], %s57
      %s59 = sshll.u32 [#allocation7], 4
      %s60 = int_to_ptr.vmem [resolvable:$true] %s59
      %65 = dma.hbm_to_vmem [thread:$0]  %s7, 8192, %s60, [#allocation6], 256, 256, 16
    $region33: #{critic_forward.1} parent=1 // pred_fallthru
      _
    // Predicated region
    $region34: #{critic_forward.1} parent=1 // pred_check
      _
    $region35: #{critic_forward.1} parent=1 // pred_check_branch
      %67 = sbr.rel (0) target = $region37
    $region36: #{critic_forward.1} parent=1 // pred_region
      _
    $region37: #{critic_forward.1} parent=1 // pred_fallthru
      _
    // Predicated region
    $region38: #{critic_forward.1} parent=1 // pred_check
      _
    $region39: #{critic_forward.1} parent=1 // pred_check_branch
      %69 = sbr.rel (0) target = $region41
    $region40: #{critic_forward.1} parent=1 // pred_region
      _
    $region41: #{critic_forward.1} parent=1 // pred_fallthru
      _
    // Predicated region
    $region42: #{critic_forward.1} parent=1 // pred_check
      _
    $region43: #{critic_forward.1} parent=1 // pred_check_branch
      %71 = sbr.rel (0) target = $region45
    $region44: #{critic_forward.1} parent=1 // pred_region
      _
    $region45: #{critic_forward.1} parent=1 // pred_fallthru
      _
    // Predicated region
    $region46: #{critic_forward.1} parent=1 // pred_check
      _
    $region47: #{critic_forward.1} parent=1 // pred_check_branch
      %73 = sbr.rel (0) target = $region49
    $region48: #{critic_forward.1} parent=1 // pred_region
      %74 = dma.done [#allocation4], 1536
    $region49: #{critic_forward.1} parent=1 // pred_fallthru
      _
    // Predicated region
    $region50: #{critic_forward.1} parent=1 // pred_check
      _
    $region51: #{critic_forward.1} parent=1 // pred_check_branch
      %76 = sbr.rel (0) target = $region53
    $region52: #{critic_forward.1} parent=1 // pred_region
      %77 = dma.done [#allocation6], 8192
    $region53: #{critic_forward.1} parent=1 // pred_fallthru
      _
    // Predicated region
    $region54: #{critic_forward.1} parent=1 // pred_check
      _
    $region55: #{critic_forward.1} parent=1 // pred_check_branch
      %79 = sbr.rel (0) target = $region57
    $region56: #{critic_forward.1} parent=1 // pred_region
      %80 = dma.done [#allocation6], 8192
    $region57: #{critic_forward.1} parent=1 // pred_fallthru
      _
    %v81 = vld [vmem:[%s0] sm:$0xff]
    %v82 = vld [vmem:[%s1] sm:$0xff]
    %v83 = vld [vmem:[#allocation3] sm:$0xff]
    %v84 = vld [vmem:[#allocation3 + $0x8] sm:$0xff]
    %v85 = vld [vmem:[#allocation3 + $0x10] sm:$0xff]
    %v86 = vld [vmem:[#allocation3 + $0x18] sm:$0xff]
    %v87 = vld [vmem:[#allocation3 + $0x20] sm:$0xff]
    %v88 = vld [vmem:[#allocation3 + $0x28] sm:$0xff]
    %v89 = vld [vmem:[#allocation3 + $0x30] sm:$0xff]
    %v90 = vld [vmem:[#allocation3 + $0x38] sm:$0xff]
    %v91 = vld [vmem:[#allocation3 + $0x40] sm:$0xff]
    %v92 = vld [vmem:[#allocation3 + $0x48] sm:$0xff]
    %v93 = vld [vmem:[#allocation3 + $0x50] sm:$0xff]
    %v94 = vld [vmem:[#allocation3 + $0x58] sm:$0xff]
    %v95 = vld [vmem:[%s3] sm:$0x3]
    %v97 = vlaneseq
    %v98 = vshrl.u32 %v97, 7
    %v99 = vsub.s32 0, %v98
    %v100 = vrot.slane %v95, %v99
    %v101 = vlaneseq
    %v102 = vshrl.u32 %v101, 7
    %v103 = vsub.s32 1, %v102
    %v104 = vrot.slane %v95, %v103
    %vm107 = vcmask 392192
    %v109 = vsel %vm107, %v81, 0
    %111 = vmatprep.subr.mxu0 0.0
    %112 = vmatpush1.msra.mxu0 0.0
    %113 = vmatprep.subr.mxu0 0.0
    %114 = vmatpush1.msra.mxu0 0.0
    %115 = vmatprep.subr.mxu0 0.0
    %116 = vmatpush1.msra.mxu0 0.0
    %117 = vmatprep.subr.mxu0 0.0
    %118 = vmatpush1.msra.mxu0 0.0
    %119 = vmatprep.subr.mxu0 0.0
    %120 = vmatpush1.msra.mxu0 0.0
    %121 = vmatprep.subr.mxu0 0.0
    %122 = vmatpush1.msra.mxu0 0.0
    %123 = vmatprep.subr.mxu0 0.0
    %124 = vmatpush1.msra.mxu0 0.0
    %125 = vmatprep.subr.mxu0 0.0
    %126 = vmatpush1.msra.mxu0 0.0
    %127 = vmatprep.subr.mxu0 0.0
    %128 = vmatpush1.msra.mxu0 0.0
    %129 = vmatprep.subr.mxu0 0.0
    %130 = vmatpush1.msra.mxu0 0.0
    %131 = vmatprep.subr.mxu0 %v94
    %132 = vmatpush1.msra.mxu0 %v93
    %133 = vmatprep.subr.mxu0 %v92
    %134 = vmatpush1.msra.mxu0 %v91
    %135 = vmatprep.subr.mxu0 %v90
    %136 = vmatpush1.msra.mxu0 %v89
    %137 = vmatprep.subr.mxu0 %v88
    %138 = vmatpush1.msra.mxu0 %v87
    %139 = vmatprep.subr.mxu0 %v86
    %140 = vmatpush1.msra.mxu0 %v85
    %141 = vmatprep.subr.mxu0 %v84
    %142 = vmatpush1.msra.mxu0 %v83
    %143 = vmatprep.subr.mxu0 0.0
    %144 = vmatpush2.msra.mxu0 0.0
    %145 = vmatprep.subr.mxu0 0.0
    %146 = vmatpush2.msra.mxu0 0.0
    %147 = vmatprep.subr.mxu0 0.0
    %148 = vmatpush2.msra.mxu0 0.0
    %149 = vmatprep.subr.mxu0 0.0
    %150 = vmatpush2.msra.mxu0 0.0
    %151 = vmatprep.subr.mxu0 0.0
    %152 = vmatpush2.msra.mxu0 0.0
    %153 = vmatprep.subr.mxu0 0.0
    %154 = vmatpush2.msra.mxu0 0.0
    %155 = vmatprep.subr.mxu0 0.0
    %156 = vmatpush2.msra.mxu0 0.0
    %157 = vmatprep.subr.mxu0 0.0
    %158 = vmatpush2.msra.mxu0 0.0
    %159 = vmatprep.subr.mxu0 0.0
    %160 = vmatpush2.msra.mxu0 0.0
    %161 = vmatprep.subr.mxu0 0.0
    %162 = vmatpush2.msra.mxu0 0.0
    %163 = vmatprep.subr.mxu0 0.0
    %164 = vmatpush2.msra.mxu0 0.0
    %165 = vmatprep.subr.mxu0 0.0
    %166 = vmatpush2.msra.mxu0 0.0
    %167 = vmatprep.subr.mxu0 0.0
    %168 = vmatpush2.msra.mxu0 0.0
    %169 = vmatprep.subr.mxu0 0.0
    %170 = vmatpush2.msra.mxu0 0.0
    %171 = vmatprep.subr.mxu0 0.0
    %172 = vmatpush2.msra.mxu0 0.0
    %173 = vmatprep.subr.mxu0 0.0
    %174 = vmatpush2.msra.mxu0 0.0
    %175 = vmatprep.mubr.f32.mxu0 0.0
    %176 = vmatmul.mubr.f32.gmra.mxu0 %v109
    %v177 = vpop.f32.mrf.mxu0
    %v178 = vadd.f32 %v100, %v177
    %v179 = vpop.f32.mrf.mxu0
    %v180 = vadd.f32 %v104, %v179
    %181 = vdwg.mxu0
    %v182 = vmul.f32 %v178, 0.0001
    %v183 = vmul.f32 %v180, 0.0001
    %v184 = vmax.f32 %v178, %v182
    %v185 = vmax.f32 %v180, %v183
    %v186 = vmul.f32 %v82, 0.01
    %v187 = vmax.f32 %v82, %v186
    %v188 = vld [vmem:[#allocation5] sm:$0xff]
    %v189 = vld [vmem:[#allocation5 + $0x8] sm:$0xff]
    %v190 = vld [vmem:[#allocation5 + $0x10] sm:$0xff]
    %v191 = vld [vmem:[#allocation5 + $0x18] sm:$0xff]
    %v192 = vld [vmem:[#allocation5 + $0x20] sm:$0xff]
    %v193 = vld [vmem:[#allocation5 + $0x28] sm:$0xff]
    %v194 = vld [vmem:[#allocation5 + $0x30] sm:$0xff]
    %v195 = vld [vmem:[#allocation5 + $0x38] sm:$0xff]
    %v196 = vld [vmem:[#allocation5 + $0x40] sm:$0xff]
    %v197 = vld [vmem:[#allocation5 + $0x48] sm:$0xff]
    %v198 = vld [vmem:[#allocation5 + $0x50] sm:$0xff]
    %v199 = vld [vmem:[#allocation5 + $0x58] sm:$0xff]
    %v200 = vld [vmem:[#allocation5 + $0x60] sm:$0xff]
    %v201 = vld [vmem:[#allocation5 + $0x68] sm:$0xff]
    %v202 = vld [vmem:[#allocation5 + $0x70] sm:$0xff]
    %v203 = vld [vmem:[#allocation5 + $0x78] sm:$0xff]
    %v204 = vld [vmem:[#allocation5 + $0x80] sm:$0xff]
    %v205 = vld [vmem:[#allocation5 + $0x88] sm:$0xff]
    %v206 = vld [vmem:[#allocation5 + $0x90] sm:$0xff]
    %v207 = vld [vmem:[#allocation5 + $0x98] sm:$0xff]
    %v208 = vld [vmem:[#allocation5 + $0xa0] sm:$0xff]
    %v209 = vld [vmem:[#allocation5 + $0xa8] sm:$0xff]
    %v210 = vld [vmem:[#allocation5 + $0xb0] sm:$0xff]
    %v211 = vld [vmem:[#allocation5 + $0xb8] sm:$0xff]
    %v212 = vld [vmem:[#allocation5 + $0xc0] sm:$0xff]
    %v213 = vld [vmem:[#allocation5 + $0xc8] sm:$0xff]
    %v214 = vld [vmem:[#allocation5 + $0xd0] sm:$0xff]
    %v215 = vld [vmem:[#allocation5 + $0xd8] sm:$0xff]
    %v216 = vld [vmem:[#allocation5 + $0xe0] sm:$0xff]
    %v217 = vld [vmem:[#allocation5 + $0xe8] sm:$0xff]
    %v218 = vld [vmem:[#allocation5 + $0xf0] sm:$0xff]
    %v219 = vld [vmem:[#allocation5 + $0xf8] sm:$0xff]
    %v220 = vld [vmem:[#allocation5 + $0x100] sm:$0xff]
    %v221 = vld [vmem:[#allocation5 + $0x108] sm:$0xff]
    %v222 = vld [vmem:[#allocation5 + $0x110] sm:$0xff]
    %v223 = vld [vmem:[#allocation5 + $0x118] sm:$0xff]
    %v224 = vld [vmem:[#allocation5 + $0x120] sm:$0xff]
    %v225 = vld [vmem:[#allocation5 + $0x128] sm:$0xff]
    %v226 = vld [vmem:[#allocation5 + $0x130] sm:$0xff]
    %v227 = vld [vmem:[#allocation5 + $0x138] sm:$0xff]
    %v228 = vld [vmem:[#allocation5 + $0x140] sm:$0xff]
    %v229 = vld [vmem:[#allocation5 + $0x148] sm:$0xff]
    %v230 = vld [vmem:[#allocation5 + $0x150] sm:$0xff]
    %v231 = vld [vmem:[#allocation5 + $0x158] sm:$0xff]
    %v232 = vld [vmem:[#allocation5 + $0x160] sm:$0xff]
    %v233 = vld [vmem:[#allocation5 + $0x168] sm:$0xff]
    %v234 = vld [vmem:[#allocation5 + $0x170] sm:$0xff]
    %v235 = vld [vmem:[#allocation5 + $0x178] sm:$0xff]
    %v236 = vld [vmem:[#allocation5 + $0x180] sm:$0xff]
    %v237 = vld [vmem:[#allocation5 + $0x188] sm:$0xff]
    %v238 = vld [vmem:[#allocation5 + $0x190] sm:$0xff]
    %v239 = vld [vmem:[#allocation5 + $0x198] sm:$0xff]
    %v240 = vld [vmem:[#allocation5 + $0x1a0] sm:$0xff]
    %v241 = vld [vmem:[#allocation5 + $0x1a8] sm:$0xff]
    %v242 = vld [vmem:[#allocation5 + $0x1b0] sm:$0xff]
    %v243 = vld [vmem:[#allocation5 + $0x1b8] sm:$0xff]
    %v244 = vld [vmem:[#allocation5 + $0x1c0] sm:$0xff]
    %v245 = vld [vmem:[#allocation5 + $0x1c8] sm:$0xff]
    %v246 = vld [vmem:[#allocation5 + $0x1d0] sm:$0xff]
    %v247 = vld [vmem:[#allocation5 + $0x1d8] sm:$0xff]
    %v248 = vld [vmem:[#allocation5 + $0x1e0] sm:$0xff]
    %v249 = vld [vmem:[#allocation5 + $0x1e8] sm:$0xff]
    %v250 = vld [vmem:[#allocation5 + $0x1f0] sm:$0xff]
    %v251 = vld [vmem:[#allocation5 + $0x1f8] sm:$0xff]
    %v252 = vld [vmem:[%s5] sm:$0xff]
    %v254 = vcombine.high %v252, %v252
    %vm255 = vcmask 31744
    %v257 = vsel %vm255, %v187, 0
    %vm259 = vcmask 1043456
    %v260 = vsel %vm259, %v252, 0
    %v262 = vsel %vm259, %v254, 0
    %264 = vmatprep.subr.mxu0 0.0
    %265 = vmatpush1.msra.mxu0 0.0
    %266 = vmatprep.subr.mxu0 0.0
    %267 = vmatpush1.msra.mxu0 0.0
    %268 = vmatprep.subr.mxu0 0.0
    %269 = vmatpush1.msra.mxu0 0.0
    %270 = vmatprep.subr.mxu0 0.0
    %271 = vmatpush1.msra.mxu0 0.0
    %272 = vmatprep.subr.mxu0 0.0
    %273 = vmatpush1.msra.mxu0 0.0
    %274 = vmatprep.subr.mxu0 0.0
    %275 = vmatpush1.msra.mxu0 0.0
    %276 = vmatprep.subr.mxu0 0.0
    %277 = vmatpush1.msra.mxu0 0.0
    %278 = vmatprep.subr.mxu0 0.0
    %279 = vmatpush1.msra.mxu0 0.0
    %280 = vmatprep.subr.mxu0 0.0
    %281 = vmatpush1.msra.mxu0 0.0
    %282 = vmatprep.subr.mxu0 0.0
    %283 = vmatpush1.msra.mxu0 0.0
    %284 = vmatprep.subr.mxu0 0.0
    %285 = vmatpush1.msra.mxu0 0.0
    %286 = vmatprep.subr.mxu0 0.0
    %287 = vmatpush1.msra.mxu0 0.0
    %288 = vmatprep.subr.mxu0 0.0
    %289 = vmatpush1.msra.mxu0 0.0
    %290 = vmatprep.subr.mxu0 0.0
    %291 = vmatpush1.msra.mxu0 0.0
    %292 = vmatprep.subr.mxu0 0.0
    %293 = vmatpush1.msra.mxu0 0.0
    %294 = vmatprep.subr.mxu0 %v262
    %295 = vmatpush1.msra.mxu0 %v260
    %296 = vmatprep.subr.mxu0 0.0
    %297 = vmatpush2.msra.mxu0 0.0
    %298 = vmatprep.subr.mxu0 0.0
    %299 = vmatpush2.msra.mxu0 0.0
    %300 = vmatprep.subr.mxu0 0.0
    %301 = vmatpush2.msra.mxu0 0.0
    %302 = vmatprep.subr.mxu0 0.0
    %303 = vmatpush2.msra.mxu0 0.0
    %304 = vmatprep.subr.mxu0 0.0
    %305 = vmatpush2.msra.mxu0 0.0
    %306 = vmatprep.subr.mxu0 0.0
    %307 = vmatpush2.msra.mxu0 0.0
    %308 = vmatprep.subr.mxu0 0.0
    %309 = vmatpush2.msra.mxu0 0.0
    %310 = vmatprep.subr.mxu0 0.0
    %311 = vmatpush2.msra.mxu0 0.0
    %312 = vmatprep.subr.mxu0 0.0
    %313 = vmatpush2.msra.mxu0 0.0
    %314 = vmatprep.subr.mxu0 0.0
    %315 = vmatpush2.msra.mxu0 0.0
    %316 = vmatprep.subr.mxu0 0.0
    %317 = vmatpush2.msra.mxu0 0.0
    %318 = vmatprep.subr.mxu0 0.0
    %319 = vmatpush2.msra.mxu0 0.0
    %320 = vmatprep.subr.mxu0 0.0
    %321 = vmatpush2.msra.mxu0 0.0
    %322 = vmatprep.subr.mxu0 0.0
    %323 = vmatpush2.msra.mxu0 0.0
    %324 = vmatprep.subr.mxu0 0.0
    %325 = vmatpush2.msra.mxu0 0.0
    %326 = vmatprep.subr.mxu0 0.0
    %327 = vmatpush2.msra.mxu0 0.0
    %328 = vmatprep.mubr.f32.mxu0 0.0
    %329 = vmatmul.mubr.f32.gmra.mxu0 %v257
    %v330 = vpop.f32.mrf.mxu0
    %v331 = vadd.f32 0.0, %v330
    %v332 = vpop.f32.mrf.mxu0
    %v333 = vadd.f32 0.0, %v332
    %334 = vdwg.mxu0
    %335 = vmatprep.subr.mxu0 %v219
    %336 = vmatpush1.msra.mxu0 %v218
    %337 = vmatprep.subr.mxu0 %v217
    %338 = vmatpush1.msra.mxu0 %v216
    %339 = vmatprep.subr.mxu0 %v215
    %340 = vmatpush1.msra.mxu0 %v214
    %341 = vmatprep.subr.mxu0 %v213
    %342 = vmatpush1.msra.mxu0 %v212
    %343 = vmatprep.subr.mxu0 %v211
    %344 = vmatpush1.msra.mxu0 %v210
    %345 = vmatprep.subr.mxu0 %v209
    %346 = vmatpush1.msra.mxu0 %v208
    %347 = vmatprep.subr.mxu0 %v207
    %348 = vmatpush1.msra.mxu0 %v206
    %349 = vmatprep.subr.mxu0 %v205
    %350 = vmatpush1.msra.mxu0 %v204
    %351 = vmatprep.subr.mxu0 %v203
    %352 = vmatpush1.msra.mxu0 %v202
    %353 = vmatprep.subr.mxu0 %v201
    %354 = vmatpush1.msra.mxu0 %v200
    %355 = vmatprep.subr.mxu0 %v199
    %356 = vmatpush1.msra.mxu0 %v198
    %357 = vmatprep.subr.mxu0 %v197
    %358 = vmatpush1.msra.mxu0 %v196
    %359 = vmatprep.subr.mxu0 %v195
    %360 = vmatpush1.msra.mxu0 %v194
    %361 = vmatprep.subr.mxu0 %v193
    %362 = vmatpush1.msra.mxu0 %v192
    %363 = vmatprep.subr.mxu0 %v191
    %364 = vmatpush1.msra.mxu0 %v190
    %365 = vmatprep.subr.mxu0 %v189
    %366 = vmatpush1.msra.mxu0 %v188
    %367 = vmatprep.subr.mxu0 %v251
    %368 = vmatpush2.msra.mxu0 %v250
    %369 = vmatprep.subr.mxu0 %v249
    %370 = vmatpush2.msra.mxu0 %v248
    %371 = vmatprep.subr.mxu0 %v247
    %372 = vmatpush2.msra.mxu0 %v246
    %373 = vmatprep.subr.mxu0 %v245
    %374 = vmatpush2.msra.mxu0 %v244
    %375 = vmatprep.subr.mxu0 %v243
    %376 = vmatpush2.msra.mxu0 %v242
    %377 = vmatprep.subr.mxu0 %v241
    %378 = vmatpush2.msra.mxu0 %v240
    %379 = vmatprep.subr.mxu0 %v239
    %380 = vmatpush2.msra.mxu0 %v238
    %381 = vmatprep.subr.mxu0 %v237
    %382 = vmatpush2.msra.mxu0 %v236
    %383 = vmatprep.subr.mxu0 %v235
    %384 = vmatpush2.msra.mxu0 %v234
    %385 = vmatprep.subr.mxu0 %v233
    %386 = vmatpush2.msra.mxu0 %v232
    %387 = vmatprep.subr.mxu0 %v231
    %388 = vmatpush2.msra.mxu0 %v230
    %389 = vmatprep.subr.mxu0 %v229
    %390 = vmatpush2.msra.mxu0 %v228
    %391 = vmatprep.subr.mxu0 %v227
    %392 = vmatpush2.msra.mxu0 %v226
    %393 = vmatprep.subr.mxu0 %v225
    %394 = vmatpush2.msra.mxu0 %v224
    %395 = vmatprep.subr.mxu0 %v223
    %396 = vmatpush2.msra.mxu0 %v222
    %397 = vmatprep.subr.mxu0 %v221
    %398 = vmatpush2.msra.mxu0 %v220
    %399 = vmatprep.mubr.f32.mxu0 %v185
    %400 = vmatmul.mubr.f32.gmra.mxu0 %v184
    %v401 = vpop.f32.mrf.mxu0
    %v402 = vadd.f32 %v331, %v401
    %v403 = vpop.f32.mrf.mxu0
    %v404 = vadd.f32 %v333, %v403
    %405 = vdwg.mxu0
    %v406 = vld [vmem:[%s6] sm:$0x3]
    %v408 = vlaneseq
    %v409 = vshrl.u32 %v408, 7
    %v410 = vsub.s32 0, %v409
    %v411 = vrot.slane %v406, %v410
    %v412 = vlaneseq
    %v413 = vshrl.u32 %v412, 7
    %v414 = vsub.s32 1, %v413
    %v415 = vrot.slane %v406, %v414
    %v418 = vadd.f32 %v402, %v411
    %v419 = vadd.f32 %v404, %v415
    %v420 = vmul.f32 %v418, 0.01
    %v421 = vmul.f32 %v419, 0.01
    %v422 = vmax.f32 %v418, %v420
    %v423 = vmax.f32 %v419, %v421
    %v424 = vld [vmem:[#allocation7] sm:$0xff]
    %v425 = vld [vmem:[#allocation7 + $0x8] sm:$0xff]
    %v426 = vld [vmem:[#allocation7 + $0x10] sm:$0xff]
    %v427 = vld [vmem:[#allocation7 + $0x18] sm:$0xff]
    %v428 = vld [vmem:[#allocation7 + $0x20] sm:$0xff]
    %v429 = vld [vmem:[#allocation7 + $0x28] sm:$0xff]
    %v430 = vld [vmem:[#allocation7 + $0x30] sm:$0xff]
    %v431 = vld [vmem:[#allocation7 + $0x38] sm:$0xff]
    %v432 = vld [vmem:[#allocation7 + $0x40] sm:$0xff]
    %v433 = vld [vmem:[#allocation7 + $0x48] sm:$0xff]
    %v434 = vld [vmem:[#allocation7 + $0x50] sm:$0xff]
    %v435 = vld [vmem:[#allocation7 + $0x58] sm:$0xff]
    %v436 = vld [vmem:[#allocation7 + $0x60] sm:$0xff]
    %v437 = vld [vmem:[#allocation7 + $0x68] sm:$0xff]
    %v438 = vld [vmem:[#allocation7 + $0x70] sm:$0xff]
    %v439 = vld [vmem:[#allocation7 + $0x78] sm:$0xff]
    %v440 = vld [vmem:[#allocation7 + $0x80] sm:$0xff]
    %v441 = vld [vmem:[#allocation7 + $0x88] sm:$0xff]
    %v442 = vld [vmem:[#allocation7 + $0x90] sm:$0xff]
    %v443 = vld [vmem:[#allocation7 + $0x98] sm:$0xff]
    %v444 = vld [vmem:[#allocation7 + $0xa0] sm:$0xff]
    %v445 = vld [vmem:[#allocation7 + $0xa8] sm:$0xff]
    %v446 = vld [vmem:[#allocation7 + $0xb0] sm:$0xff]
    %v447 = vld [vmem:[#allocation7 + $0xb8] sm:$0xff]
    %v448 = vld [vmem:[#allocation7 + $0xc0] sm:$0xff]
    %v449 = vld [vmem:[#allocation7 + $0xc8] sm:$0xff]
    %v450 = vld [vmem:[#allocation7 + $0xd0] sm:$0xff]
    %v451 = vld [vmem:[#allocation7 + $0xd8] sm:$0xff]
    %v452 = vld [vmem:[#allocation7 + $0xe0] sm:$0xff]
    %v453 = vld [vmem:[#allocation7 + $0xe8] sm:$0xff]
    %v454 = vld [vmem:[#allocation7 + $0xf0] sm:$0xff]
    %v455 = vld [vmem:[#allocation7 + $0xf8] sm:$0xff]
    %v456 = vld [vmem:[#allocation7 + $0x100] sm:$0xff]
    %v457 = vld [vmem:[#allocation7 + $0x108] sm:$0xff]
    %v458 = vld [vmem:[#allocation7 + $0x110] sm:$0xff]
    %v459 = vld [vmem:[#allocation7 + $0x118] sm:$0xff]
    %v460 = vld [vmem:[#allocation7 + $0x120] sm:$0xff]
    %v461 = vld [vmem:[#allocation7 + $0x128] sm:$0xff]
    %v462 = vld [vmem:[#allocation7 + $0x130] sm:$0xff]
    %v463 = vld [vmem:[#allocation7 + $0x138] sm:$0xff]
    %v464 = vld [vmem:[#allocation7 + $0x140] sm:$0xff]
    %v465 = vld [vmem:[#allocation7 + $0x148] sm:$0xff]
    %v466 = vld [vmem:[#allocation7 + $0x150] sm:$0xff]
    %v467 = vld [vmem:[#allocation7 + $0x158] sm:$0xff]
    %v468 = vld [vmem:[#allocation7 + $0x160] sm:$0xff]
    %v469 = vld [vmem:[#allocation7 + $0x168] sm:$0xff]
    %v470 = vld [vmem:[#allocation7 + $0x170] sm:$0xff]
    %v471 = vld [vmem:[#allocation7 + $0x178] sm:$0xff]
    %v472 = vld [vmem:[#allocation7 + $0x180] sm:$0xff]
    %v473 = vld [vmem:[#allocation7 + $0x188] sm:$0xff]
    %v474 = vld [vmem:[#allocation7 + $0x190] sm:$0xff]
    %v475 = vld [vmem:[#allocation7 + $0x198] sm:$0xff]
    %v476 = vld [vmem:[#allocation7 + $0x1a0] sm:$0xff]
    %v477 = vld [vmem:[#allocation7 + $0x1a8] sm:$0xff]
    %v478 = vld [vmem:[#allocation7 + $0x1b0] sm:$0xff]
    %v479 = vld [vmem:[#allocation7 + $0x1b8] sm:$0xff]
    %v480 = vld [vmem:[#allocation7 + $0x1c0] sm:$0xff]
    %v481 = vld [vmem:[#allocation7 + $0x1c8] sm:$0xff]
    %v482 = vld [vmem:[#allocation7 + $0x1d0] sm:$0xff]
    %v483 = vld [vmem:[#allocation7 + $0x1d8] sm:$0xff]
    %v484 = vld [vmem:[#allocation7 + $0x1e0] sm:$0xff]
    %v485 = vld [vmem:[#allocation7 + $0x1e8] sm:$0xff]
    %v486 = vld [vmem:[#allocation7 + $0x1f0] sm:$0xff]
    %v487 = vld [vmem:[#allocation7 + $0x1f8] sm:$0xff]
    %v488 = vld [vmem:[%s8] sm:$0x3]
    %v490 = vlaneseq
    %v491 = vshrl.u32 %v490, 7
    %v492 = vsub.s32 0, %v491
    %v493 = vrot.slane %v488, %v492
    %v494 = vlaneseq
    %v495 = vshrl.u32 %v494, 7
    %v496 = vsub.s32 1, %v495
    %v497 = vrot.slane %v488, %v496
    %500 = vmatprep.subr.mxu0 %v455
    %501 = vmatpush1.msra.mxu0 %v454
    %502 = vmatprep.subr.mxu0 %v453
    %503 = vmatpush1.msra.mxu0 %v452
    %504 = vmatprep.subr.mxu0 %v451
    %505 = vmatpush1.msra.mxu0 %v450
    %506 = vmatprep.subr.mxu0 %v449
    %507 = vmatpush1.msra.mxu0 %v448
    %508 = vmatprep.subr.mxu0 %v447
    %509 = vmatpush1.msra.mxu0 %v446
    %510 = vmatprep.subr.mxu0 %v445
    %511 = vmatpush1.msra.mxu0 %v444
    %512 = vmatprep.subr.mxu0 %v443
    %513 = vmatpush1.msra.mxu0 %v442
    %514 = vmatprep.subr.mxu0 %v441
    %515 = vmatpush1.msra.mxu0 %v440
    %516 = vmatprep.subr.mxu0 %v439
    %517 = vmatpush1.msra.mxu0 %v438
    %518 = vmatprep.subr.mxu0 %v437
    %519 = vmatpush1.msra.mxu0 %v436
    %520 = vmatprep.subr.mxu0 %v435
    %521 = vmatpush1.msra.mxu0 %v434
    %522 = vmatprep.subr.mxu0 %v433
    %523 = vmatpush1.msra.mxu0 %v432
    %524 = vmatprep.subr.mxu0 %v431
    %525 = vmatpush1.msra.mxu0 %v430
    %526 = vmatprep.subr.mxu0 %v429
    %527 = vmatpush1.msra.mxu0 %v428
    %528 = vmatprep.subr.mxu0 %v427
    %529 = vmatpush1.msra.mxu0 %v426
    %530 = vmatprep.subr.mxu0 %v425
    %531 = vmatpush1.msra.mxu0 %v424
    %532 = vmatprep.subr.mxu0 %v487
    %533 = vmatpush2.msra.mxu0 %v486
    %534 = vmatprep.subr.mxu0 %v485
    %535 = vmatpush2.msra.mxu0 %v484
    %536 = vmatprep.subr.mxu0 %v483
    %537 = vmatpush2.msra.mxu0 %v482
    %538 = vmatprep.subr.mxu0 %v481
    %539 = vmatpush2.msra.mxu0 %v480
    %540 = vmatprep.subr.mxu0 %v479
    %541 = vmatpush2.msra.mxu0 %v478
    %542 = vmatprep.subr.mxu0 %v477
    %543 = vmatpush2.msra.mxu0 %v476
    %544 = vmatprep.subr.mxu0 %v475
    %545 = vmatpush2.msra.mxu0 %v474
    %546 = vmatprep.subr.mxu0 %v473
    %547 = vmatpush2.msra.mxu0 %v472
    %548 = vmatprep.subr.mxu0 %v471
    %549 = vmatpush2.msra.mxu0 %v470
    %550 = vmatprep.subr.mxu0 %v469
    %551 = vmatpush2.msra.mxu0 %v468
    %552 = vmatprep.subr.mxu0 %v467
    %553 = vmatpush2.msra.mxu0 %v466
    %554 = vmatprep.subr.mxu0 %v465
    %555 = vmatpush2.msra.mxu0 %v464
    %556 = vmatprep.subr.mxu0 %v463
    %557 = vmatpush2.msra.mxu0 %v462
    %558 = vmatprep.subr.mxu0 %v461
    %559 = vmatpush2.msra.mxu0 %v460
    %560 = vmatprep.subr.mxu0 %v459
    %561 = vmatpush2.msra.mxu0 %v458
    %562 = vmatprep.subr.mxu0 %v457
    %563 = vmatpush2.msra.mxu0 %v456
    %564 = vmatprep.mubr.f32.mxu0 %v423
    %565 = vmatmul.mubr.f32.gmra.mxu0 %v422
    %v566 = vpop.f32.mrf.mxu0
    %v567 = vadd.f32 %v493, %v566
    %v568 = vpop.f32.mrf.mxu0
    %v569 = vadd.f32 %v497, %v568
    %570 = vdwg.mxu0
    %v571 = vmul.f32 %v567, 0.01
    %v572 = vmul.f32 %v569, 0.01
    %v573 = vmax.f32 %v567, %v571
    %v574 = vmax.f32 %v569, %v572
    %v575 = vld [vmem:[%s9] sm:$0x3]
    %v577 = vlaneseq
    %v578 = vshrl.u32 %v577, 7
    %v579 = vsub.s32 0, %v578
    %v580 = vrot.slane %v575, %v579
    %v581 = vlaneseq
    %v582 = vshrl.u32 %v581, 7
    %v583 = vsub.s32 1, %v582
    %v584 = vrot.slane %v575, %v583
    %v587 = vmul.f32 %v573, %v580
    %v588 = vmul.f32 %v574, %v584
    %v589 = vadd.f32 %v587, %v588
    %590 = vadd.xlane.f32.xlu0 %v589
    %v591 = vpop.xlane.xlu0 %590
    %v592 = vld [vmem:[#allocation2] sm:$0x1]
    %v594 = vlaneseq
    %v595 = vshrl.u32 %v594, 7
    %v596 = vsub.s32 0, %v595
    %v597 = vrot.slane %v592, %v596
    %v599 = vadd.f32 %v591, %v597
    %vm600 = vcmask 7168
    %601 = vst.msk [vmem:[%s11] sm:$0xff] %vm600, %v599
    // Predicated region
    $region58: #{critic_forward.1} parent=1 // pred_check
      _
    $region59: #{critic_forward.1} parent=1 // pred_check_branch
      %603 = sbr.rel (0) target = $region61
    $region60: #{critic_forward.1} parent=1 // pred_region
      _
    $region61: #{critic_forward.1} parent=1 // pred_fallthru
      _
    // Predicated region
    $region62: #{critic_forward.1} parent=1 // pred_check
      _
    $region63: #{critic_forward.1} parent=1 // pred_check_branch
      %605 = sbr.rel (0) target = $region65
    $region64: #{critic_forward.1} parent=1 // pred_region
      _
    $region65: #{critic_forward.1} parent=1 // pred_fallthru
      _
    %606 = vsyncpa [#allocation4], 1
    %607 = vsyncpa [#allocation6], 1

</llo_original>
